<compile_context>
chip_gen: v6e
topology: v6e:2x2x1
jax: 0.10.0
libtpu: 0.0.40
codegen_flags: <defaults>
</compile_context>

<pallas_src>
import jax
import jax.numpy as jnp
from jax.experimental import pallas as pl
from jax.experimental.pallas import tpu as pltpu

HIDDEN = 128          # fc1 output width (fixed by the module)
MAX_TB = 512          # batch-tile ceiling (multiple of 8; sweep 512/1024 if desired)


def _round_up(n, m):
    return ((n + m - 1) // m) * m


def _pick_batch_tiling(B, max_tb=MAX_TB):
    """Pick (tile_rows, padded_batch).

    - small B: pad only to a multiple of 8 (single tile, at most 7 wasted rows)
    - mid B (>=128 rows): split into 2 tiles so v7x's two TensorCores both work
    - large B: 512-row tiles to amortize per-grid-step overhead
    """
    b8 = _round_up(B, 8)
    if b8 <= max_tb:
        tb = _round_up((b8 + 1) // 2, 8) if b8 >= 128 else b8
    else:
        tb = max_tb
    b_p = _round_up(B, tb)
    return tb, b_p


def mlp_kernel(x_ref, w1_ref, b1_ref, w2_ref, b2_ref, o_ref):
    # x arrives unpadded in f32; cast to bf16 on the VPU right before the MXU.
    x_bf16 = x_ref[...].astype(jnp.bfloat16)

    # fc1: bf16 x bf16 -> f32 accumulate on the MXU
    h = jnp.dot(x_bf16, w1_ref[...], preferred_element_type=jnp.float32)
    # bias + ReLU in f32 (b1 is [1, H], broadcasts over the batch tile)
    h = jnp.maximum(h + b1_ref[...], 0.0)

    # fc2: cast hidden back to bf16 for the MXU, accumulate in f32
    logits = jnp.dot(h.astype(w2_ref.dtype), w2_ref[...],
                     preferred_element_type=jnp.float32)
    logits = logits + b2_ref[...]

    # numerically-stable softmax over the (unpadded) class axis; exact divide
    # so rows sum to 1 (epilogue is not the bottleneck).
    m = jnp.max(logits, axis=-1, keepdims=True)
    e = jnp.exp(logits - m)
    denom = jnp.sum(e, axis=-1, keepdims=True)
    o_ref[...] = (e / denom).astype(o_ref.dtype)


def neural_network_forward(x, w1, b1, w2, b2, *, max_tb=MAX_TB):
    """x: [B, D_in] f32; w1: [D_in, H]; b1: [H]; w2: [H, D_out]; b2: [D_out].

    Weights are stored pre-transposed vs. PyTorch (in_features on rows) so the
    kernel computes plain row-major matmuls.
    """
    B, D_in = x.shape
    H = w1.shape[1]
    D_out = w2.shape[1]
    assert H == HIDDEN

    tb, b_p = _pick_batch_tiling(B, max_tb)
    num_tiles = b_p // tb

    # Only the batch dim is (minimally) padded; x stays f32 and unpadded in D_in.
    x_in = x if b_p == B else jnp.zeros((b_p, D_in), x.dtype).at[:B].set(x)

    w1_bf = w1.astype(jnp.bfloat16)
    w2_bf = w2.astype(jnp.bfloat16)
    b1_2d = b1.reshape(1, H).astype(jnp.float32)
    b2_2d = b2.reshape(1, D_out).astype(jnp.float32)

    # --- explicit VMEM budget for the chosen tiles (double-buffered I/O) ----
    vmem_bytes = (
        2 * tb * D_in * 4                                   # x tile, f32, 2 bufs
        + 2 * tb * D_out * 4                                # out tile, f32, 2 bufs
        + 2 * (D_in * H * 2 + H * D_out * 2 + H * 4 + D_out * 4)  # params
        + 4 * tb * H * 4                                    # h/logits/exp headroom
    )
    vmem_limit = int(min(max(2 * vmem_bytes, 4 << 20), 32 << 20))

    out = pl.pallas_call(
        mlp_kernel,
        out_shape=jax.ShapeDtypeStruct((b_p, D_out), jnp.float32),
        grid_spec=pl.GridSpec(
            grid=(num_tiles,),
            in_specs=[
                pl.BlockSpec((tb, D_in), lambda i: (i, 0)),   # x: batch-tiled, unpadded
                pl.BlockSpec((D_in, H), lambda i: (0, 0)),    # w1: resident
                pl.BlockSpec((1, H), lambda i: (0, 0)),       # b1: resident
                pl.BlockSpec((H, D_out), lambda i: (0, 0)),   # w2: resident
                pl.BlockSpec((1, D_out), lambda i: (0, 0)),   # b2: resident
            ],
            out_specs=pl.BlockSpec((tb, D_out), lambda i: (i, 0)),
        ),
        compiler_params=pltpu.CompilerParams(
            dimension_semantics=("parallel",),   # megacore sharding on v7x
            vmem_limit_bytes=vmem_limit,
        ),
    )(x_in, w1_bf, b1_2d, w2_bf, b2_2d)

    # strip (at most tb-1 rows of) batch padding; no class padding to strip
    return out if b_p == B else out[:B]


def _reference(x, w1, b1, w2, b2):
    return jax.nn.softmax(jnp.maximum(x @ w1 + b1, 0.0) @ w2 + b2, axis=1)


if __name__ == "__main__":
    # Small shapes consistent with the module: input_dim=32, hidden=128, output_dim=16
    D_in, H, D_out = 32, HIDDEN, 16

    key = jax.random.PRNGKey(0)
    kx, k1, k2, k3, k4, kx2 = jax.random.split(key, 6)

    # Deterministic parameter init (uniform, roughly nn.Linear-like scale)
    w1 = jax.random.uniform(k1, (D_in, H), jnp.float32, -1.0, 1.0) / jnp.sqrt(D_in)
    b1 = jax.random.uniform(k2, (H,), jnp.float32, -1.0, 1.0) / jnp.sqrt(D_in)
    w2 = jax.random.uniform(k3, (H, D_out), jnp.float32, -1.0, 1.0) / jnp.sqrt(H)
    b2 = jax.random.uniform(k4, (D_out,), jnp.float32, -1.0, 1.0) / jnp.sqrt(H)

    # --- main small-batch run (single tile, no padding) ---------------------
    B = 8
    x = jax.random.normal(kx, (B, D_in), dtype=jnp.float32)
    out = neural_network_forward(x, w1, b1, w2, b2)
    jax.block_until_ready(out)

    ref = _reference(x, w1, b1, w2, b2)
    assert out.shape == (B, D_out)
    assert jnp.allclose(out, ref, atol=2e-2), "mismatch vs JAX reference"
    assert jnp.allclose(jnp.sum(out, axis=1), 1.0, atol=1e-3), "rows not normalized"

    # --- exercise the multi-tile / parallel-grid path as well ----------------
    B2 = 272
    x2 = jax.random.normal(kx2, (B2, D_in), dtype=jnp.float32)
    out2 = neural_network_forward(x2, w1, b1, w2, b2)
    jax.block_until_ready(out2)
    ref2 = _reference(x2, w1, b1, w2, b2)
    assert out2.shape == (B2, D_out)
    assert jnp.allclose(out2, ref2, atol=2e-2), "multi-tile mismatch vs JAX reference"
    assert jnp.allclose(jnp.sum(out2, axis=1), 1.0, atol=1e-3), "multi-tile rows not normalized"

    print("KERNEL_OK")
</pallas_src>

<mosaic_0001>
module attributes {stable_mosaic.version = 11 : i64} {
  func.func @mlp_kernel(%arg0: i32, %arg1: memref<8x32xf32, #tpu.memory_space<vmem>>, %arg2: memref<32x128xbf16, #tpu.memory_space<vmem>>, %arg3: memref<1x128xf32, #tpu.memory_space<vmem>>, %arg4: memref<128x16xbf16, #tpu.memory_space<vmem>>, %arg5: memref<1x16xf32, #tpu.memory_space<vmem>>, %arg6: memref<8x16xf32, #tpu.memory_space<vmem>>) attributes {dimension_semantics = [#tpu.dimension_semantics<parallel>], iteration_bounds = array<i64: 1>, scalar_prefetch = 0 : i64, scratch_operands = 0 : i64, tpu.core_type = #tpu.core_type<tc>, window_params = [{transform_indices = @transform_0, window_bounds = array<i64: 8, 32>}, {pipeline_mode = #tpu.pipeline_mode<synchronous>, transform_indices = @transform_1, window_bounds = array<i64: 32, 128>}, {pipeline_mode = #tpu.pipeline_mode<synchronous>, transform_indices = @transform_2, window_bounds = array<i64: 1, 128>}, {pipeline_mode = #tpu.pipeline_mode<synchronous>, transform_indices = @transform_3, window_bounds = array<i64: 128, 16>}, {pipeline_mode = #tpu.pipeline_mode<synchronous>, transform_indices = @transform_4, window_bounds = array<i64: 1, 16>}, {transform_indices = @transform_5, window_bounds = array<i64: 8, 16>}]} {
    %c0 = arith.constant 0 : index
    %c0_0 = arith.constant 0 : index
    %0 = vector.load %arg1[%c0, %c0_0] : memref<8x32xf32, #tpu.memory_space<vmem>>, vector<8x32xf32>
    %1 = arith.truncf %0 : vector<8x32xf32> to vector<8x32xbf16>
    %c0_1 = arith.constant 0 : index
    %c0_2 = arith.constant 0 : index
    %2 = vector.load %arg2[%c0_1, %c0_2] : memref<32x128xbf16, #tpu.memory_space<vmem>>, vector<32x128xbf16>
    %cst = arith.constant dense<0.000000e+00> : vector<8x128xf32>
    %3 = tpu.matmul %1, %2, %cst {dimension_numbers = #tpu.dot_dimension_numbers<[1], [0], [0], [1], [0, 0, 1, 1], [], []>} : vector<8x32xbf16>, vector<32x128xbf16>, vector<8x128xf32> -> vector<8x128xf32>
    %c0_3 = arith.constant 0 : index
    %c0_4 = arith.constant 0 : index
    %4 = vector.load %arg3[%c0_3, %c0_4] : memref<1x128xf32, #tpu.memory_space<vmem>>, vector<1x128xf32>
    %5 = vector.broadcast %4 : vector<1x128xf32> to vector<8x128xf32>
    %6 = arith.addf %3, %5 : vector<8x128xf32>
    %cst_5 = arith.constant 0.000000e+00 : f32
    %7 = vector.broadcast %cst_5 : f32 to vector<8x128xf32>
    %8 = arith.maximumf %6, %7 : vector<8x128xf32>
    %9 = arith.truncf %8 : vector<8x128xf32> to vector<8x128xbf16>
    %c0_6 = arith.constant 0 : index
    %c0_7 = arith.constant 0 : index
    %10 = vector.load %arg4[%c0_6, %c0_7] : memref<128x16xbf16, #tpu.memory_space<vmem>>, vector<128x16xbf16>
    %cst_8 = arith.constant dense<0.000000e+00> : vector<8x16xf32>
    %11 = tpu.matmul %9, %10, %cst_8 {dimension_numbers = #tpu.dot_dimension_numbers<[1], [0], [0], [1], [0, 0, 1, 1], [], []>} : vector<8x128xbf16>, vector<128x16xbf16>, vector<8x16xf32> -> vector<8x16xf32>
    %c0_9 = arith.constant 0 : index
    %c0_10 = arith.constant 0 : index
    %12 = vector.load %arg5[%c0_9, %c0_10] : memref<1x16xf32, #tpu.memory_space<vmem>>, vector<1x16xf32>
    %13 = vector.broadcast %12 : vector<1x16xf32> to vector<8x16xf32>
    %14 = arith.addf %11, %13 : vector<8x16xf32>
    %cst_11 = arith.constant dense<0xFF800000> : vector<8xf32>
    %15 = vector.multi_reduction <maximumf>, %14, %cst_11 [1] : vector<8x16xf32> to vector<8xf32>
    %16 = vector.shape_cast %15 : vector<8xf32> to vector<8x1xf32>
    %17 = vector.broadcast %16 : vector<8x1xf32> to vector<8x16xf32>
    %18 = arith.subf %14, %17 : vector<8x16xf32>
    %19 = math.exp %18 : vector<8x16xf32>
    %cst_12 = arith.constant dense<0.000000e+00> : vector<8xf32>
    %20 = vector.multi_reduction <add>, %19, %cst_12 [1] : vector<8x16xf32> to vector<8xf32>
    %21 = vector.shape_cast %20 : vector<8xf32> to vector<8x1xf32>
    %22 = vector.broadcast %21 : vector<8x1xf32> to vector<8x16xf32>
    %23 = arith.divf %19, %22 : vector<8x16xf32>
    %c0_13 = arith.constant 0 : index
    %c0_14 = arith.constant 0 : index
    %24 = vector.load %arg6[%c0_13, %c0_14] : memref<8x16xf32, #tpu.memory_space<vmem>>, vector<8x16xf32>
    tpu.vector_store %arg6[%c0_13, %c0_14], %23 {strides = array<i32>} : memref<8x16xf32, #tpu.memory_space<vmem>>, vector<8x16xf32>,
    return
  }
  func.func @transform_0(%arg0: i32) -> (i32, i32) {
    %c0_i32 = arith.constant 0 : i32
    %c0_i32_0 = arith.constant 0 : i32
    return %arg0, %c0_i32 : i32, i32
  }
  func.func @transform_1(%arg0: i32) -> (i32, i32) {
    %c0_i32 = arith.constant 0 : i32
    %c0_i32_0 = arith.constant 0 : i32
    %c0_i32_1 = arith.constant 0 : i32
    return %c0_i32, %c0_i32_0 : i32, i32
  }
  func.func @transform_2(%arg0: i32) -> (i32, i32) {
    %c0_i32 = arith.constant 0 : i32
    %c0_i32_0 = arith.constant 0 : i32
    %c0_i32_1 = arith.constant 0 : i32
    return %c0_i32, %c0_i32_0 : i32, i32
  }
  func.func @transform_3(%arg0: i32) -> (i32, i32) {
    %c0_i32 = arith.constant 0 : i32
    %c0_i32_0 = arith.constant 0 : i32
    %c0_i32_1 = arith.constant 0 : i32
    return %c0_i32, %c0_i32_0 : i32, i32
  }
  func.func @transform_4(%arg0: i32) -> (i32, i32) {
    %c0_i32 = arith.constant 0 : i32
    %c0_i32_0 = arith.constant 0 : i32
    %c0_i32_1 = arith.constant 0 : i32
    return %c0_i32, %c0_i32_0 : i32, i32
  }
  func.func @transform_5(%arg0: i32) -> (i32, i32) {
    %c0_i32 = arith.constant 0 : i32
    %c0_i32_0 = arith.constant 0 : i32
    return %arg0, %c0_i32 : i32, i32
  }
}

</mosaic_0001>

<llo_original>
// kernel: tpu_custom_call.1
$region0: #{tpu_custom_call.1}
  #allocation0 [shape = 'u32[]', space=smem, size = 0x4, offset = 0x4, fixed_abs, tag = 'smem constant byte address 0x4 - core index']
  #allocation1 [shape = 'u32[144,128]{1,0:T(1,128)}', space=vmem, size = 0x12000, scoped, tag = 'internal scratch']
  %s0 = inlined_call_operand.vmem [shape: f32[8,32], index: 0, kind: input, shape index: {}]
  %s1 = inlined_call_operand.vmem [shape: bf16[32,128], index: 1, kind: input, shape index: {}]
  %s2 = inlined_call_operand.vmem [shape: f32[1,128], index: 2, kind: input, shape index: {}]
  %s3 = inlined_call_operand.vmem [shape: bf16[128,16], index: 3, kind: input, shape index: {}]
  %s4 = inlined_call_operand.vmem [shape: f32[1,16], index: 4, kind: input, shape index: {}]
  %s5 = inlined_call_operand.hbm [shape: f32[8,16], index: 5, kind: output, shape index: {}]
  %s6 = sld [smem:[#allocation0]]
  $region30: #{tpu_custom_call.1} parent=0
    _
  %s8 = ssub.s32 1, %s6
  %s9 = scalar_select 0, %s8, %s6
  $region1: #{tpu_custom_call.1} parent=0
    #allocation2 [shape = 'u8[4096]{0}', space=vmem, size = 0x1000, scoped, tag = 'output window, operand 0, single buffered']
    #allocation3 [shape = 's32[1]{0}', space=sflag, size = 0x4, scoped, tag = 'scoped memory for tpu_custom_call.1']
    %10 = vsyncpa [#allocation3], 0
    // Predicated region
    $region2: #{tpu_custom_call.1} parent=1 // pred_check
      _
    $region3: #{tpu_custom_call.1} parent=1 // pred_check_branch
      %12 = sbr.rel (0) target = $region5
    $region4: #{tpu_custom_call.1} parent=1 // pred_region
      _
    $region5: #{tpu_custom_call.1} parent=1 // pred_fallthru
      _
    // Predicated region
    $region6: #{tpu_custom_call.1} parent=1 // pred_check
      _
    $region7: #{tpu_custom_call.1} parent=1 // pred_check_branch
      %14 = sbr.rel (0) target = $region9
    $region8: #{tpu_custom_call.1} parent=1 // pred_region
      _
    $region9: #{tpu_custom_call.1} parent=1 // pred_fallthru
      _
    // Predicated region
    $region10: #{tpu_custom_call.1} parent=1 // pred_check
      _
    $region11: #{tpu_custom_call.1} parent=1 // pred_check_branch
      %16 = sbr.rel (0) target = $region13
    $region12: #{tpu_custom_call.1} parent=1 // pred_region
      _
    $region13: #{tpu_custom_call.1} parent=1 // pred_fallthru
      _
    // Predicated region
    $region14: #{tpu_custom_call.1} parent=1 // pred_check
      _
    $region15: #{tpu_custom_call.1} parent=1 // pred_check_branch
      %18 = sbr.rel (0) target = $region17
    $region16: #{tpu_custom_call.1} parent=1 // pred_region
      _
    $region17: #{tpu_custom_call.1} parent=1 // pred_fallthru
      _
    // Predicated region
    $region18: #{tpu_custom_call.1} parent=1 // pred_check
      _
    $region19: #{tpu_custom_call.1} parent=1 // pred_check_branch
      %20 = sbr.rel (0) target = $region21
    $region20: #{tpu_custom_call.1} parent=1 // pred_region
      _
    $region21: #{tpu_custom_call.1} parent=1 // pred_fallthru
      _
    %v22 = vld [vmem:[%s0] sm:$0xff]
    %v23 = vpack.c.bf16 %v22, %v22
    %v24 = vld [vmem:[%s1] sm:$0xf]
    %v25 = vld [vmem:[%s1 + $0x4] sm:$0xf]
    %v26 = vld [vmem:[%s1 + $0x8] sm:$0xf]
    %v27 = vld [vmem:[%s1 + $0xc] sm:$0xf]
    %v28 = vld [vmem:[%s2] sm:$0x1]
    %v30 = vlaneseq
    %v31 = vshrl.u32 %v30, 7
    %v32 = vsub.s32 0, %v31
    %v33 = vrot.slane %v28, %v32
    %v39 = vunpack.c.l.b16 %v24
    %v40 = vunpack.c.l.b16 %v25
    %v41 = vunpack.c.l.b16 %v26
    %v42 = vunpack.c.l.b16 %v27
    %v43 = vpack.c.b16 %v40, %v39
    %v44 = vpack.c.b16 %v42, %v41
    %vm47 = vcmask 261120
    %v49 = vsel %vm47, %v23, 0
    %51 = vmatprep.subr.bf16.mxu0 0
    %52 = vmatpush1.bf16.msra.mxu0 0
    %53 = vmatprep.subr.bf16.mxu0 0
    %54 = vmatpush1.bf16.msra.mxu0 0
    %55 = vmatprep.subr.bf16.mxu0 0
    %56 = vmatpush1.bf16.msra.mxu0 0
    %57 = vmatprep.subr.bf16.mxu0 0
    %58 = vmatpush1.bf16.msra.mxu0 0
    %59 = vmatprep.subr.bf16.mxu0 0
    %60 = vmatpush1.bf16.msra.mxu0 0
    %61 = vmatprep.subr.bf16.mxu0 0
    %62 = vmatpush1.bf16.msra.mxu0 0
    %63 = vmatprep.subr.bf16.mxu0 0
    %64 = vmatpush1.bf16.msra.mxu0 %v44
    %65 = vmatprep.subr.bf16.mxu0 0
    %66 = vmatpush1.bf16.msra.mxu0 %v43
    %67 = vmatprep.subr.bf16.mxu0 0
    %68 = vmatpush2.bf16.msra.mxu0 0
    %69 = vmatprep.subr.bf16.mxu0 0
    %70 = vmatpush2.bf16.msra.mxu0 0
    %71 = vmatprep.subr.bf16.mxu0 0
    %72 = vmatpush2.bf16.msra.mxu0 0
    %73 = vmatprep.subr.bf16.mxu0 0
    %74 = vmatpush2.bf16.msra.mxu0 0
    %75 = vmatprep.subr.bf16.mxu0 0
    %76 = vmatpush2.bf16.msra.mxu0 0
    %77 = vmatprep.subr.bf16.mxu0 0
    %78 = vmatpush2.bf16.msra.mxu0 0
    %79 = vmatprep.subr.bf16.mxu0 0
    %80 = vmatpush2.bf16.msra.mxu0 0
    %81 = vmatprep.subr.bf16.mxu0 0
    %82 = vmatpush2.bf16.msra.mxu0 0
    %83 = vmatprep.mubr.bf16.mxu0 0
    %84 = vmatmul.mubr.bf16.gmra.mxu0 %v49
    %v85 = vpop.f32.mrf.mxu0
    %v86 = vadd.f32 %v33, %v85
    %v87 = vpop.f32.mrf.mxu0
    %v88 = vpop.f32.mrf.mxu0
    %v89 = vpop.f32.mrf.mxu0
    %90 = vdwg.mxu0
    %v91 = vmax.f32 %v86, 0.0
    %v92 = vpack.c.bf16 %v91, %v91
    %v93 = vld [vmem:[%s3] sm:$0xf]
    %v94 = vld [vmem:[%s3 + $0x4] sm:$0xf]
    %v95 = vld [vmem:[%s3 + $0x8] sm:$0xf]
    %v96 = vld [vmem:[%s3 + $0xc] sm:$0xf]
    %v97 = vld [vmem:[%s3 + $0x10] sm:$0xf]
    %v98 = vld [vmem:[%s3 + $0x14] sm:$0xf]
    %v99 = vld [vmem:[%s3 + $0x18] sm:$0xf]
    %v100 = vld [vmem:[%s3 + $0x1c] sm:$0xf]
    %v101 = vld [vmem:[%s3 + $0x20] sm:$0xf]
    %v102 = vld [vmem:[%s3 + $0x24] sm:$0xf]
    %v103 = vld [vmem:[%s3 + $0x28] sm:$0xf]
    %v104 = vld [vmem:[%s3 + $0x2c] sm:$0xf]
    %v105 = vld [vmem:[%s3 + $0x30] sm:$0xf]
    %v106 = vld [vmem:[%s3 + $0x34] sm:$0xf]
    %v107 = vld [vmem:[%s3 + $0x38] sm:$0xf]
    %v108 = vld [vmem:[%s3 + $0x3c] sm:$0xf]
    %v109 = vld [vmem:[%s4] sm:$0x1]
    %v111 = vlaneseq
    %v112 = vshrl.u32 %v111, 7
    %v113 = vsub.s32 0, %v112
    %v114 = vrot.slane %v109, %v113
    %v132 = vunpack.c.l.b16 %v93
    %v133 = vunpack.c.l.b16 %v94
    %v134 = vunpack.c.l.b16 %v95
    %v135 = vunpack.c.l.b16 %v96
    %v136 = vunpack.c.l.b16 %v97
    %v137 = vunpack.c.l.b16 %v98
    %v138 = vunpack.c.l.b16 %v99
    %v139 = vunpack.c.l.b16 %v100
    %v140 = vunpack.c.l.b16 %v101
    %v141 = vunpack.c.l.b16 %v102
    %v142 = vunpack.c.l.b16 %v103
    %v143 = vunpack.c.l.b16 %v104
    %v144 = vunpack.c.l.b16 %v105
    %v145 = vunpack.c.l.b16 %v106
    %v146 = vunpack.c.l.b16 %v107
    %v147 = vunpack.c.l.b16 %v108
    %v148 = vpack.c.b16 %v133, %v132
    %v149 = vpack.c.b16 %v135, %v134
    %v150 = vpack.c.b16 %v137, %v136
    %v151 = vpack.c.b16 %v139, %v138
    %v152 = vpack.c.b16 %v141, %v140
    %v153 = vpack.c.b16 %v143, %v142
    %v154 = vpack.c.b16 %v145, %v144
    %v155 = vpack.c.b16 %v147, %v146
    %164 = vmatprep.subr.bf16.mxu0 0
    %165 = vmatpush1.bf16.msra.mxu0 %v155
    %166 = vmatprep.subr.bf16.mxu0 0
    %167 = vmatpush1.bf16.msra.mxu0 %v154
    %168 = vmatprep.subr.bf16.mxu0 0
    %169 = vmatpush1.bf16.msra.mxu0 %v153
    %170 = vmatprep.subr.bf16.mxu0 0
    %171 = vmatpush1.bf16.msra.mxu0 %v152
    %172 = vmatprep.subr.bf16.mxu0 0
    %173 = vmatpush1.bf16.msra.mxu0 %v151
    %174 = vmatprep.subr.bf16.mxu0 0
    %175 = vmatpush1.bf16.msra.mxu0 %v150
    %176 = vmatprep.subr.bf16.mxu0 0
    %177 = vmatpush1.bf16.msra.mxu0 %v149
    %178 = vmatprep.subr.bf16.mxu0 0
    %179 = vmatpush1.bf16.msra.mxu0 %v148
    %180 = vmatprep.subr.bf16.mxu0 0
    %181 = vmatpush2.bf16.msra.mxu0 0
    %182 = vmatprep.subr.bf16.mxu0 0
    %183 = vmatpush2.bf16.msra.mxu0 0
    %184 = vmatprep.subr.bf16.mxu0 0
    %185 = vmatpush2.bf16.msra.mxu0 0
    %186 = vmatprep.subr.bf16.mxu0 0
    %187 = vmatpush2.bf16.msra.mxu0 0
    %188 = vmatprep.subr.bf16.mxu0 0
    %189 = vmatpush2.bf16.msra.mxu0 0
    %190 = vmatprep.subr.bf16.mxu0 0
    %191 = vmatpush2.bf16.msra.mxu0 0
    %192 = vmatprep.subr.bf16.mxu0 0
    %193 = vmatpush2.bf16.msra.mxu0 0
    %194 = vmatprep.subr.bf16.mxu0 0
    %195 = vmatpush2.bf16.msra.mxu0 0
    %196 = vmatprep.mubr.bf16.mxu0 0
    %197 = vmatmul.mubr.bf16.gmra.mxu0 %v92
    %v198 = vpop.f32.mrf.mxu0
    %v199 = vadd.f32 %v114, %v198
    %v200 = vpop.f32.mrf.mxu0
    %v201 = vpop.f32.mrf.mxu0
    %v202 = vpop.f32.mrf.mxu0
    %203 = vdwg.mxu0
    %vm204 = vcmask 130048
    %v205 = vsel %vm204, %v199, -inf
    %206 = vmax.xlane.f32.xlu0 %v205
    %v207 = vpop.xlane.xlu0 %206
    %v208 = vsub.f32 %v199, %v207
    %v209 = vmul.f32 %v208, 1.442695
    %v210 = vpow.pop %v209
    %v211 = vsel %vm204, %v210, 0.0
    %212 = vadd.xlane.f32.xlu0 %v211
    %v213 = vpop.xlane.xlu0 %212
    %v214 = vrcp.pop %v213
    %v215 = vmul.f32 %v210, %v214
    %216 = vst.msk [vmem:[#allocation2] sm:$0xff] %vm204, %v215
    // Predicated region
    $region22: #{tpu_custom_call.1} parent=1 // pred_check
      _
    $region23: #{tpu_custom_call.1} parent=1 // pred_check_branch
      %218 = sbr.rel (0) target = $region25
    $region24: #{tpu_custom_call.1} parent=1 // pred_region
      %s220 = ssub.s32 128, 128
      %221 = vsyncadd [#allocation3], %s220
      %s223 = sshll.u32 [#allocation2], 4
      %s224 = int_to_ptr.vmem [resolvable:$true] %s223
      %226 = dma.vmem_to_hbm [thread:$0]  %s224, 128, %s5, [#allocation3]
    $region25: #{tpu_custom_call.1} parent=1 // pred_fallthru
      _
    // Predicated region
    $region26: #{tpu_custom_call.1} parent=1 // pred_check
      _
    $region27: #{tpu_custom_call.1} parent=1 // pred_check_branch
      %228 = sbr.rel (0) target = $region29
    $region28: #{tpu_custom_call.1} parent=1 // pred_region
      %229 = dma.done [#allocation3], 128
    $region29: #{tpu_custom_call.1} parent=1 // pred_fallthru
      _
    %230 = vsyncpa [#allocation3], 1

</llo_original>
